<compile_context>
chip_gen: v5e
topology: v5e:2x2
jax: 0.10.0
libtpu: 0.0.40
codegen_flags: <defaults>
</compile_context>

<pallas_src>
import functools

import jax
import jax.numpy as jnp
from jax import lax
from jax.experimental import pallas as pl
from jax.experimental.pallas import tpu as pltpu


def _attn_kernel(e_ref, d_ref, o_ref, *, nb, h_dim, he_dim, two_dir):
    # e_ref: (S, NB*He) lane-dense block covering NB consecutive batch elements.
    # d_ref: (T, NB*H)  lane-dense block.
    # o_ref: (T, NB*H)  lane-dense output block.
    e_all = e_ref[...]            # native dtype, stays in vregs
    d_all = d_ref[...]

    ctx_tiles = []
    for i in range(nb):           # short, fully unrolled (NB is a small Python int)
        e_blk = e_all[:, i * he_dim:(i + 1) * he_dim]          # (S, He)
        d_i = d_all[:, i * h_dim:(i + 1) * h_dim]              # (T, H)
        if two_dir:
            # Sum the two LSTM directions in VMEM (data already on-chip).
            e_i = e_blk[:, :h_dim] + e_blk[:, h_dim:]          # (S, H)
        else:
            e_i = e_blk                                        # (S, H)

        # scores[t, s] = <D[t], E[s]>  (contract last dims -> MXU transposed-RHS
        # path, f32 accumulate, no explicit E^T materialization).
        scores = lax.dot_general(
            d_i, e_i, (((1,), (1,)), ((), ())),
            preferred_element_type=jnp.float32)                # (T, S)

        # Softmax over encoder positions S (last / lane axis), all in f32.
        # TODO(synk): on v6e/v7x the exp could run in bf16 to halve EUP pressure
        # if softmax ever dominates; kept f32 (also correct on v5e).
        m = jnp.max(scores, axis=-1, keepdims=True)            # (T, 1)
        p = jnp.exp(scores - m)                                # (T, S)
        denom = jnp.sum(p, axis=-1, keepdims=True)             # (T, 1)
        p = p * pl.reciprocal(denom, approx=True)              # EUP vrcp

        # context[t, h] = sum_s p[t, s] * E[s, h]; cast p once at the MXU boundary.
        ctx = jnp.dot(p.astype(e_i.dtype), e_i,
                      preferred_element_type=jnp.float32)      # (T, H)
        ctx_tiles.append(ctx.astype(o_ref.dtype))

    # One lane-dense store of the whole (T, NB*H) block (no per-batch masked vst).
    o_ref[...] = ctx_tiles[0] if nb == 1 else jnp.concatenate(ctx_tiles, axis=-1)


def _pad(a, m):
    return -(-a // m) * m


def _pick_nb_and_vmem(S, T, B, He, H, itemsize):
    """Pick batch-block NB and a VMEM limit sized to the real block footprint."""

    def footprint(nb):
        # (8,128)-padded, double-buffered input/output blocks + f32 intermediates.
        e_blk = _pad(S, 8) * _pad(nb * He, 128) * itemsize
        d_blk = _pad(T, 8) * _pad(nb * H, 128) * itemsize
        o_blk = _pad(T, 8) * _pad(nb * H, 128) * itemsize
        interm = 4 * nb * (_pad(T, 8) * _pad(S, 128)      # scores / p
                           + _pad(T, 8) * _pad(H, 128)    # ctx tiles
                           + _pad(S, 8) * _pad(He, 128))  # summed / work copy of E
        return 2 * (e_blk + d_blk + o_blk) + interm

    budget = 20 << 20  # comfortably inside v7x's 64 MiB per-TC VMEM
    divisors = [d for d in range(1, B + 1) if B % d == 0]
    # Lane block width must equal the full array width or be a 128 multiple
    # (legal tiling + unmasked stores), and the block must fit the VMEM budget.
    safe = [d for d in divisors
            if (d == B or ((d * He) % 128 == 0 and (d * H) % 128 == 0))
            and footprint(d) <= budget]
    if not safe:
        # Degenerate huge-shape fallback; real fix is S/T tiling (see TODO above).
        safe = [1]
    multi = [d for d in safe if B // d >= 2]
    # Keep >= 2 grid steps for v7x megacore sharding when the batch allows it;
    # for tiny batches maximize NB (single step amortizes overhead best).
    nb = max(multi) if (B >= 4 and multi) else max(safe)
    vmem = min(max(2 * footprint(nb) + (4 << 20), 8 << 20), 48 << 20)
    return nb, int(vmem)


def attention_forward(out_e, out_d, *, bidirectional=False, attn_type="dot"):
    """Pallas equivalent of Attention.forward. Returns context of shape (T, B, H)."""
    if attn_type not in ("dot", "none"):
        raise Exception("Incorrect attention type")
    if attn_type == "none":
        return None

    S, B, He = out_e.shape
    T, B2, H = out_d.shape
    assert B == B2, "batch mismatch between encoder and decoder outputs"
    if bidirectional:
        assert He == 2 * H, "bidirectional encoder hidden must be 2*h_dim"
    else:
        assert He == H, "encoder / decoder hidden size mismatch"

    nb, vmem_bytes = _pick_nb_and_vmem(S, T, B, He, H, out_e.dtype.itemsize)
    n_steps = B // nb

    # Contiguity-preserving (free) lane-dense views of the seq-first tensors.
    e2d = out_e.reshape(S, B * He)
    d2d = out_d.reshape(T, B * H)

    kernel = functools.partial(
        _attn_kernel, nb=nb, h_dim=H, he_dim=He, two_dir=bool(bidirectional))

    ctx2d = pl.pallas_call(
        kernel,
        out_shape=jax.ShapeDtypeStruct((T, B * H), out_d.dtype),
        grid_spec=pltpu.PrefetchScalarGridSpec(
            num_scalar_prefetch=0,
            grid=(n_steps,),
            in_specs=[
                pl.BlockSpec((S, nb * He), lambda b: (0, b)),
                pl.BlockSpec((T, nb * H), lambda b: (0, b)),
            ],
            out_specs=pl.BlockSpec((T, nb * H), lambda b: (0, b)),
        ),
        compiler_params=pltpu.CompilerParams(
            dimension_semantics=("parallel",),
            vmem_limit_bytes=vmem_bytes,
        ),
    )(e2d, d2d)

    return ctx2d.reshape(T, B, H)


def _reference(out_e, out_d, *, bidirectional=False):
    """Pure-JAX reference mirroring the PyTorch code exactly."""
    if bidirectional:
        S, B, H2 = out_e.shape
        out_e = out_e.reshape(S, B, 2, H2 // 2).sum(axis=2)
    e = jnp.transpose(out_e, (1, 0, 2))                 # (B, S, H)
    d = jnp.transpose(out_d, (1, 0, 2))                 # (B, T, H)
    attn = jnp.einsum("bsh,bth->bst", e, d)             # (B, S, T)
    attn = jax.nn.softmax(attn, axis=1)                 # softmax over S
    ctx = jnp.einsum("bst,bsh->bth", attn, e)           # (B, T, H)
    return jnp.transpose(ctx, (1, 0, 2))                # (T, B, H)


if __name__ == "__main__":
    # Small shapes consistent with the module: encoder len 12, decoder len 8,
    # batch 2, hidden 32.
    S, T, B, H = 12, 8, 2, 32
    key = jax.random.PRNGKey(0)
    k_e, k_d, k_e2 = jax.random.split(key, 3)

    # Unidirectional path.
    out_e = jax.random.normal(k_e, (S, B, H), dtype=jnp.float32)
    out_d = jax.random.normal(k_d, (T, B, H), dtype=jnp.float32)
    ctx = jax.block_until_ready(
        attention_forward(out_e, out_d, bidirectional=False, attn_type="dot"))
    ref = _reference(out_e, out_d, bidirectional=False)
    assert ctx.shape == (T, B, H)
    # approx reciprocal -> slightly loosened tolerance vs exact f32.
    assert jnp.allclose(ctx, ref, atol=5e-3, rtol=5e-3)

    # Bidirectional path (encoder hidden 2*H, direction-sum done in-kernel).
    out_e_bi = jax.random.normal(k_e2, (S, B, 2 * H), dtype=jnp.float32)
    ctx_bi = jax.block_until_ready(
        attention_forward(out_e_bi, out_d, bidirectional=True, attn_type="dot"))
    ref_bi = _reference(out_e_bi, out_d, bidirectional=True)
    assert ctx_bi.shape == (T, B, H)
    assert jnp.allclose(ctx_bi, ref_bi, atol=5e-3, rtol=5e-3)

    print("KERNEL_OK")
</pallas_src>

<mosaic_0001>
module attributes {stable_mosaic.version = 11 : i64} {
  func.func @_attn_kernel(%arg0: i32, %arg1: memref<12x64xf32, #tpu.memory_space<vmem>>, %arg2: memref<8x64xf32, #tpu.memory_space<vmem>>, %arg3: memref<8x64xf32, #tpu.memory_space<vmem>>) attributes {dimension_semantics = [#tpu.dimension_semantics<parallel>], iteration_bounds = array<i64: 1>, scalar_prefetch = 0 : i64, scratch_operands = 0 : i64, tpu.core_type = #tpu.core_type<tc>, window_params = [{transform_indices = @transform_0, window_bounds = array<i64: 12, 64>}, {transform_indices = @transform_1, window_bounds = array<i64: 8, 64>}, {transform_indices = @transform_2, window_bounds = array<i64: 8, 64>}]} {
    %c0 = arith.constant 0 : index
    %c0_0 = arith.constant 0 : index
    %0 = vector.load %arg1[%c0, %c0_0] : memref<12x64xf32, #tpu.memory_space<vmem>>, vector<12x64xf32>
    %c0_1 = arith.constant 0 : index
    %c0_2 = arith.constant 0 : index
    %1 = vector.load %arg2[%c0_1, %c0_2] : memref<8x64xf32, #tpu.memory_space<vmem>>, vector<8x64xf32>
    %2 = vector.extract_strided_slice %0 {offsets = [0, 0], sizes = [12, 32], strides = [1, 1]} : vector<12x64xf32> to vector<12x32xf32>
    %3 = vector.extract_strided_slice %1 {offsets = [0, 0], sizes = [8, 32], strides = [1, 1]} : vector<8x64xf32> to vector<8x32xf32>
    %cst = arith.constant dense<0.000000e+00> : vector<8x12xf32>
    %4 = tpu.matmul %3, %2, %cst {dimension_numbers = #tpu.dot_dimension_numbers<[1], [1], [0], [0], [0, 0, 1, 0], [], []>} : vector<8x32xf32>, vector<12x32xf32>, vector<8x12xf32> -> vector<8x12xf32>
    %cst_3 = arith.constant dense<0xFF800000> : vector<8xf32>
    %5 = vector.multi_reduction <maximumf>, %4, %cst_3 [1] : vector<8x12xf32> to vector<8xf32>
    %6 = vector.shape_cast %5 : vector<8xf32> to vector<8x1xf32>
    %7 = vector.broadcast %6 : vector<8x1xf32> to vector<8x12xf32>
    %8 = arith.subf %4, %7 : vector<8x12xf32>
    %9 = math.exp %8 : vector<8x12xf32>
    %cst_4 = arith.constant dense<0.000000e+00> : vector<8xf32>
    %10 = vector.multi_reduction <add>, %9, %cst_4 [1] : vector<8x12xf32> to vector<8xf32>
    %11 = vector.shape_cast %10 : vector<8xf32> to vector<8x1xf32>
    %12 = tpu.reciprocal %11 {approx = true} : vector<8x1xf32> -> vector<8x1xf32>
    %13 = vector.broadcast %12 : vector<8x1xf32> to vector<8x12xf32>
    %14 = arith.mulf %9, %13 : vector<8x12xf32>
    %cst_5 = arith.constant dense<0.000000e+00> : vector<8x32xf32>
    %15 = tpu.matmul %14, %2, %cst_5 {dimension_numbers = #tpu.dot_dimension_numbers<[1], [0], [0], [1], [0, 0, 1, 1], [], []>} : vector<8x12xf32>, vector<12x32xf32>, vector<8x32xf32> -> vector<8x32xf32>
    %16 = vector.extract_strided_slice %0 {offsets = [0, 32], sizes = [12, 32], strides = [1, 1]} : vector<12x64xf32> to vector<12x32xf32>
    %17 = vector.extract_strided_slice %1 {offsets = [0, 32], sizes = [8, 32], strides = [1, 1]} : vector<8x64xf32> to vector<8x32xf32>
    %cst_6 = arith.constant dense<0.000000e+00> : vector<8x12xf32>
    %18 = tpu.matmul %17, %16, %cst_6 {dimension_numbers = #tpu.dot_dimension_numbers<[1], [1], [0], [0], [0, 0, 1, 0], [], []>} : vector<8x32xf32>, vector<12x32xf32>, vector<8x12xf32> -> vector<8x12xf32>
    %cst_7 = arith.constant dense<0xFF800000> : vector<8xf32>
    %19 = vector.multi_reduction <maximumf>, %18, %cst_7 [1] : vector<8x12xf32> to vector<8xf32>
    %20 = vector.shape_cast %19 : vector<8xf32> to vector<8x1xf32>
    %21 = vector.broadcast %20 : vector<8x1xf32> to vector<8x12xf32>
    %22 = arith.subf %18, %21 : vector<8x12xf32>
    %23 = math.exp %22 : vector<8x12xf32>
    %cst_8 = arith.constant dense<0.000000e+00> : vector<8xf32>
    %24 = vector.multi_reduction <add>, %23, %cst_8 [1] : vector<8x12xf32> to vector<8xf32>
    %25 = vector.shape_cast %24 : vector<8xf32> to vector<8x1xf32>
    %26 = tpu.reciprocal %25 {approx = true} : vector<8x1xf32> -> vector<8x1xf32>
    %27 = vector.broadcast %26 : vector<8x1xf32> to vector<8x12xf32>
    %28 = arith.mulf %23, %27 : vector<8x12xf32>
    %cst_9 = arith.constant dense<0.000000e+00> : vector<8x32xf32>
    %29 = tpu.matmul %28, %16, %cst_9 {dimension_numbers = #tpu.dot_dimension_numbers<[1], [0], [0], [1], [0, 0, 1, 1], [], []>} : vector<8x12xf32>, vector<12x32xf32>, vector<8x32xf32> -> vector<8x32xf32>
    %30 = tpu.concatenate %15, %29 in 1 : vector<8x32xf32>, vector<8x32xf32> -> vector<8x64xf32>
    %c0_10 = arith.constant 0 : index
    %c0_11 = arith.constant 0 : index
    %31 = vector.load %arg3[%c0_10, %c0_11] : memref<8x64xf32, #tpu.memory_space<vmem>>, vector<8x64xf32>
    tpu.vector_store %arg3[%c0_10, %c0_11], %30 {strides = array<i32>} : memref<8x64xf32, #tpu.memory_space<vmem>>, vector<8x64xf32>,
    return
  }
  func.func @transform_0(%arg0: i32) -> (i32, i32) {
    %c0_i32 = arith.constant 0 : i32
    %c0_i32_0 = arith.constant 0 : i32
    return %c0_i32, %arg0 : i32, i32
  }
  func.func @transform_1(%arg0: i32) -> (i32, i32) {
    %c0_i32 = arith.constant 0 : i32
    %c0_i32_0 = arith.constant 0 : i32
    return %c0_i32, %arg0 : i32, i32
  }
  func.func @transform_2(%arg0: i32) -> (i32, i32) {
    %c0_i32 = arith.constant 0 : i32
    %c0_i32_0 = arith.constant 0 : i32
    return %c0_i32, %arg0 : i32, i32
  }
}

</mosaic_0001>

<llo_original>
// kernel: tpu_custom_call.1
$region0: #{tpu_custom_call.1}
  #allocation0 [shape = 'u32[]', space=smem, size = 0x4, offset = 0x4, fixed_abs, tag = 'smem constant byte address 0x4 - core index']
  #allocation1 [shape = 'u32[72,128]{1,0:T(1,128)}', space=vmem, size = 0x9000, scoped, tag = 'internal scratch']
  %s0 = inlined_call_operand.hbm [shape: f32[12,64], index: 0, kind: input, shape index: {}]
  %s1 = inlined_call_operand.hbm [shape: f32[8,64], index: 1, kind: input, shape index: {}]
  %s2 = inlined_call_operand.hbm [shape: f32[8,64], index: 2, kind: output, shape index: {}]
  %s3 = sld [smem:[#allocation0]]
  $region26: #{tpu_custom_call.1} parent=0
    _
  %s5 = ssub.s32 1, %s3
  %s6 = scalar_select 0, %s5, %s3
  $region1: #{tpu_custom_call.1} parent=0
    #allocation2 [shape = 'u8[8192]{0}', space=vmem, size = 0x2000, scoped, tag = 'input window, operand 0, single buffered']
    #allocation3 [shape = 's32[1]{0}', space=sflag, size = 0x4, scoped, tag = 'scoped memory for tpu_custom_call.1']
    #allocation4 [shape = 's32[1]{0}', space=sflag, size = 0x4, scoped, tag = 'scoped memory for tpu_custom_call.1']
    #allocation5 [shape = 'u8[4096]{0}', space=vmem, size = 0x1000, scoped, tag = 'input window, operand 1, single buffered']
    #allocation6 [shape = 's32[1]{0}', space=sflag, size = 0x4, scoped, tag = 'scoped memory for tpu_custom_call.1']
    #allocation7 [shape = 'u8[4096]{0}', space=vmem, size = 0x1000, scoped, tag = 'output window, operand 0, single buffered']
    %7 = vsyncpa [#allocation3], 0
    %8 = vsyncpa [#allocation6], 0
    %9 = vsyncpa [#allocation4], 0
    // Predicated region
    $region2: #{tpu_custom_call.1} parent=1 // pred_check
      _
    $region3: #{tpu_custom_call.1} parent=1 // pred_check_branch
      %11 = sbr.rel (0) target = $region5
    $region4: #{tpu_custom_call.1} parent=1 // pred_region
      %13 = vsyncadd [#allocation3], 0
      %s14 = sshll.u32 %s0, 4
      %s15 = int_to_ptr.hbm [resolvable:$true] %s14
      %s16 = sshll.u32 [#allocation2], 4
      %s17 = int_to_ptr.vmem [resolvable:$true] %s16
      %22 = dma.hbm_to_vmem [thread:$0]  %s15, 256, %s17, [#allocation3], 128, 128, 8
    $region5: #{tpu_custom_call.1} parent=1 // pred_fallthru
      _
    // Predicated region
    $region6: #{tpu_custom_call.1} parent=1 // pred_check
      _
    $region7: #{tpu_custom_call.1} parent=1 // pred_check_branch
      %24 = sbr.rel (0) target = $region9
    $region8: #{tpu_custom_call.1} parent=1 // pred_region
      %26 = vsyncadd [#allocation6], 0
      %s28 = sshll.u32 %s1, 4
      %s29 = int_to_ptr.hbm [resolvable:$true] %s28
      %s30 = sshll.u32 [#allocation5], 4
      %s31 = int_to_ptr.vmem [resolvable:$true] %s30
      %33 = dma.hbm_to_vmem [thread:$0]  %s29, 128, %s31, [#allocation6]
    $region9: #{tpu_custom_call.1} parent=1 // pred_fallthru
      _
    // Predicated region
    $region10: #{tpu_custom_call.1} parent=1 // pred_check
      _
    $region11: #{tpu_custom_call.1} parent=1 // pred_check_branch
      %35 = sbr.rel (0) target = $region13
    $region12: #{tpu_custom_call.1} parent=1 // pred_region
      %37 = dma.done [#allocation3], 256
    $region13: #{tpu_custom_call.1} parent=1 // pred_fallthru
      _
    // Predicated region
    $region14: #{tpu_custom_call.1} parent=1 // pred_check
      _
    $region15: #{tpu_custom_call.1} parent=1 // pred_check_branch
      %39 = sbr.rel (0) target = $region17
    $region16: #{tpu_custom_call.1} parent=1 // pred_region
      %41 = dma.done [#allocation6], 128
    $region17: #{tpu_custom_call.1} parent=1 // pred_fallthru
      _
    %v42 = vld [vmem:[#allocation2] sm:$0xff]
    %v43 = vld [vmem:[#allocation2 + $0x8] sm:$0xf]
    %v44 = vld [vmem:[#allocation5] sm:$0xff]
    %vm45 = vcmask 261120
    %v47 = vsel %vm45, %v44, 0
    %v50 = vsel %vm45, %v42, 0
    %v53 = vsel %vm45, %v43, 0
    %55 = vmatpush.xpose.msra.mxu0 0.0
    %56 = vmatpush.xpose.msra.mxu0 0.0
    %57 = vmatpush.xpose.msra.mxu0 0.0
    %58 = vmatpush.xpose.msra.mxu0 0.0
    %59 = vmatpush.xpose.msra.mxu0 0.0
    %60 = vmatpush.xpose.msra.mxu0 0.0
    %61 = vmatpush.xpose.msra.mxu0 0.0
    %62 = vmatpush.xpose.msra.mxu0 0.0
    %63 = vmatpush.xpose.msra.mxu0 0.0
    %64 = vmatpush.xpose.msra.mxu0 0.0
    %65 = vmatpush.xpose.msra.mxu0 0.0
    %66 = vmatpush.xpose.msra.mxu0 0.0
    %67 = vmatpush.xpose.msra.mxu0 0.0
    %68 = vmatpush.xpose.msra.mxu0 0.0
    %69 = vmatpush.xpose.msra.mxu0 %v53
    %70 = vmatpush.xpose.msra.mxu0 %v50
    %71 = vmatmul.f32.gmra.mxu0 %v47
    %v72 = vpop.f32.mrf.mxu0
    %v73 = vadd.f32 0.0, %v72
    %74 = vdwg.mxu0
    %vm75 = vcmask 97280
    %v76 = vsel %vm75, %v73, -inf
    %77 = vmax.xlane.f32.xlu0 %v76
    %v78 = vpop.xlane.xlu0 %77
    %v79 = vsub.f32 %v73, %v78
    %v80 = vmul.f32 %v79, 1.442695
    %v81 = vpow.pop %v80
    %v82 = vsel %vm75, %v81, 0.0
    %83 = vadd.xlane.f32.xlu0 %v82
    %v84 = vpop.xlane.xlu0 %83
    %v85 = vrcp.pop %v84
    %v86 = vmul.f32 %v81, %v85
    %v88 = vsel %vm75, %v86, 0
    %vm90 = vcmask 1043456
    %v91 = vsel %vm90, %v43, 0
    %93 = vmatpush.msra.mxu0 0.0
    %94 = vmatpush.msra.mxu0 0.0
    %95 = vmatpush.msra.mxu0 0.0
    %96 = vmatpush.msra.mxu0 0.0
    %97 = vmatpush.msra.mxu0 0.0
    %98 = vmatpush.msra.mxu0 0.0
    %99 = vmatpush.msra.mxu0 0.0
    %100 = vmatpush.msra.mxu0 0.0
    %101 = vmatpush.msra.mxu0 0.0
    %102 = vmatpush.msra.mxu0 0.0
    %103 = vmatpush.msra.mxu0 0.0
    %104 = vmatpush.msra.mxu0 0.0
    %105 = vmatpush.msra.mxu0 0.0
    %106 = vmatpush.msra.mxu0 0.0
    %107 = vmatpush.msra.mxu0 %v91
    %108 = vmatpush.msra.mxu0 %v42
    %109 = vmatmul.f32.gmra.mxu0 %v88
    %v110 = vpop.f32.mrf.mxu0
    %v111 = vadd.f32 0.0, %v110
    %112 = vdwg.mxu0
    %113 = vrot.lane.b32.xlu0 %v44, 96
    %v114 = vpop.permute.xlu0 %113
    %115 = vrot.lane.b32.xlu0 %v42, 96
    %v116 = vpop.permute.xlu0 %115
    %117 = vrot.lane.b32.xlu0 %v43, 96
    %v118 = vpop.permute.xlu0 %117
    %v119 = vsel %vm45, %v114, 0
    %v121 = vsel %vm45, %v116, 0
    %v123 = vsel %vm45, %v118, 0
    %125 = vmatpush.xpose.msra.mxu0 0.0
    %126 = vmatpush.xpose.msra.mxu0 0.0
    %127 = vmatpush.xpose.msra.mxu0 0.0
    %128 = vmatpush.xpose.msra.mxu0 0.0
    %129 = vmatpush.xpose.msra.mxu0 0.0
    %130 = vmatpush.xpose.msra.mxu0 0.0
    %131 = vmatpush.xpose.msra.mxu0 0.0
    %132 = vmatpush.xpose.msra.mxu0 0.0
    %133 = vmatpush.xpose.msra.mxu0 0.0
    %134 = vmatpush.xpose.msra.mxu0 0.0
    %135 = vmatpush.xpose.msra.mxu0 0.0
    %136 = vmatpush.xpose.msra.mxu0 0.0
    %137 = vmatpush.xpose.msra.mxu0 0.0
    %138 = vmatpush.xpose.msra.mxu0 0.0
    %139 = vmatpush.xpose.msra.mxu0 %v123
    %140 = vmatpush.xpose.msra.mxu0 %v121
    %141 = vmatmul.f32.gmra.mxu0 %v119
    %v142 = vpop.f32.mrf.mxu0
    %v143 = vadd.f32 0.0, %v142
    %144 = vdwg.mxu0
    %v145 = vsel %vm75, %v143, -inf
    %146 = vmax.xlane.f32.xlu0 %v145
    %v147 = vpop.xlane.xlu0 %146
    %v148 = vsub.f32 %v143, %v147
    %v149 = vmul.f32 %v148, 1.442695
    %v150 = vpow.pop %v149
    %v151 = vsel %vm75, %v150, 0.0
    %152 = vadd.xlane.f32.xlu0 %v151
    %v153 = vpop.xlane.xlu0 %152
    %v154 = vrcp.pop %v153
    %v155 = vmul.f32 %v150, %v154
    %v158 = vsel %vm75, %v155, 0
    %v160 = vsel %vm90, %v118, 0
    %162 = vmatpush.msra.mxu0 0.0
    %163 = vmatpush.msra.mxu0 0.0
    %164 = vmatpush.msra.mxu0 0.0
    %165 = vmatpush.msra.mxu0 0.0
    %166 = vmatpush.msra.mxu0 0.0
    %167 = vmatpush.msra.mxu0 0.0
    %168 = vmatpush.msra.mxu0 0.0
    %169 = vmatpush.msra.mxu0 0.0
    %170 = vmatpush.msra.mxu0 0.0
    %171 = vmatpush.msra.mxu0 0.0
    %172 = vmatpush.msra.mxu0 0.0
    %173 = vmatpush.msra.mxu0 0.0
    %174 = vmatpush.msra.mxu0 0.0
    %175 = vmatpush.msra.mxu0 0.0
    %176 = vmatpush.msra.mxu0 %v160
    %177 = vmatpush.msra.mxu0 %v116
    %178 = vmatmul.f32.gmra.mxu0 %v158
    %v179 = vpop.f32.mrf.mxu0
    %v180 = vadd.f32 0.0, %v179
    %181 = vdwg.mxu0
    %183 = vrot.lane.b32.xlu0 %v180, 32
    %v184 = vpop.permute.xlu0 %183
    %v186 = vsel %vm45, %v111, %v184
    %vm187 = vcmask 523264
    %188 = vst.msk [vmem:[#allocation7] sm:$0xff] %vm187, %v186
    // Predicated region
    $region18: #{tpu_custom_call.1} parent=1 // pred_check
      _
    $region19: #{tpu_custom_call.1} parent=1 // pred_check_branch
      %190 = sbr.rel (0) target = $region21
    $region20: #{tpu_custom_call.1} parent=1 // pred_region
      %192 = vsyncadd [#allocation4], 0
      %s194 = sshll.u32 [#allocation7], 4
      %s195 = int_to_ptr.vmem [resolvable:$true] %s194
      %s196 = sshll.u32 %s2, 4
      %s197 = int_to_ptr.hbm [resolvable:$true] %s196
      %199 = dma.vmem_to_hbm [thread:$0]  %s195, 128, %s197, [#allocation4]
    $region21: #{tpu_custom_call.1} parent=1 // pred_fallthru
      _
    // Predicated region
    $region22: #{tpu_custom_call.1} parent=1 // pred_check
      _
    $region23: #{tpu_custom_call.1} parent=1 // pred_check_branch
      %201 = sbr.rel (0) target = $region25
    $region24: #{tpu_custom_call.1} parent=1 // pred_region
      %203 = dma.done [#allocation4], 128
    $region25: #{tpu_custom_call.1} parent=1 // pred_fallthru
      _
    %204 = vsyncpa [#allocation3], 1
    %205 = vsyncpa [#allocation6], 1
    %206 = vsyncpa [#allocation4], 1

</llo_original>
